<compile_context>
chip_gen: v5e
topology: v5e:2x2
jax: 0.10.0
libtpu: 0.0.40
codegen_flags: <defaults>
</compile_context>

<pallas_src>
import functools

import jax
import jax.numpy as jnp
from jax import lax
from jax.experimental import pallas as pl
from jax.experimental.pallas import tpu as pltpu


_LANES = 128
_CHUNK_ROWS = 64                       # rows of 128 lanes per inner-loop iteration
_TARGET_TILE_BYTES = 6 * 1024 * 1024   # per-input streaming tile target
_VMEM_LIMIT_BYTES = 44 * 1024 * 1024   # < 48 MiB: fits v7x (64 MiB) and v5e/v6e


def _round_up(x, m):
    return (x + m - 1) // m * m


def _recon_mse_kernel(lend_ref, pred_ref, inp_ref, out_ref, *, r_tile, chunk):
    # Grid: (modality, example, row-block). pred_ref/inp_ref: (r_tile, 128) of one
    # example's flattened (T*D) values; out_ref: (8, 128) per-(m, b) partial-sum vreg.
    b = pl.program_id(1)
    f = pl.program_id(2)

    @pl.when(f == 0)
    def _():
        out_ref[...] = jnp.zeros_like(out_ref)

    lend = lend_ref[b]                         # valid flat columns = min(L_b, T) * D
    start_col = f * (r_tile * _LANES)          # first flat column of this block
    end_col = start_col + r_tile * _LANES

    # Flat column offset of each element within a chunk (constant, hoisted).
    flat_iota = (lax.broadcasted_iota(jnp.int32, (chunk, _LANES), 0) * _LANES
                 + lax.broadcasted_iota(jnp.int32, (chunk, _LANES), 1))
    n_chunks = r_tile // chunk

    def accumulate(use_mask):
        def body(c, acc):                      # acc: (8, 128) f32, stays in vregs
            r0 = pl.multiple_of(c * chunk, chunk)
            p = pred_ref[pl.ds(r0, chunk), :]
            q = inp_ref[pl.ds(r0, chunk), :]
            d = (p - q).astype(jnp.float32)    # subtract in input dtype (bf16 native)
            sq = d * d
            if use_mask:
                limit = lend - (start_col + c * (chunk * _LANES))
                sq = jnp.where(flat_iota < limit, sq, jnp.float32(0.0))
            # (chunk,128) -> (chunk//8, 8, 128) is a free vreg-view; sum = VPU adds only.
            return acc + jnp.sum(sq.reshape(chunk // 8, 8, _LANES), axis=0)

        acc8 = lax.fori_loop(0, n_chunks, body,
                             jnp.zeros((8, _LANES), jnp.float32))
        out_ref[...] += acc8                   # one vreg RMW per grid step

    # Fully-valid block: no masking ops at all.
    @pl.when(end_col <= lend)
    def _():
        accumulate(False)

    # Boundary block: mask per element. (Fully-invalid blocks contribute nothing;
    # this also covers garbage rows of ragged edge blocks, since col >= F >= lend.)
    @pl.when(jnp.logical_and(start_col < lend, end_col > lend))
    def _():
        accumulate(True)


def reconstruction_mse_loss(predicted, inputs, lengths):
    """predicted, inputs: (M, B, T, D) float arrays. lengths: (B,) ints. Scalar f32 loss."""
    M, B, T, D = predicted.shape
    assert inputs.shape == predicted.shape
    F = T * D
    F_pad = _round_up(F, _LANES)

    pred2 = predicted.reshape(M, B, F)
    inp2 = inputs.reshape(M, B, F)
    if F_pad != F:
        # Only copies when T*D is not a multiple of 128; zero padding is masked anyway.
        pad = ((0, 0), (0, 0), (0, F_pad - F))
        pred2 = jnp.pad(pred2, pad)
        inp2 = jnp.pad(inp2, pad)
    R = F_pad // _LANES                                     # 128-lane rows per example
    pred3 = pred2.reshape(M, B, R, _LANES)
    inp3 = inp2.reshape(M, B, R, _LANES)

    # Pick the row-tile: ~_TARGET_TILE_BYTES per input block, multiple of _CHUNK_ROWS.
    itemsize = jnp.dtype(predicted.dtype).itemsize
    target_rows = max(_CHUNK_ROWS,
                      (_TARGET_TILE_BYTES // (_LANES * itemsize))
                      // _CHUNK_ROWS * _CHUNK_ROWS)
    nf = max(1, -(-R // target_rows))
    r_tile = _round_up(-(-R // nf), _CHUNK_ROWS)
    nf = -(-R // r_tile)                                    # ragged last block is fine

    lengths = lengths.astype(jnp.int32)
    clamped = jnp.clip(lengths, 0, T)                       # [:length] clamps to T
    lend = clamped * D                                      # valid flat columns (int32)

    kernel = functools.partial(_recon_mse_kernel, r_tile=r_tile, chunk=_CHUNK_ROWS)
    out = pl.pallas_call(
        kernel,
        out_shape=jax.ShapeDtypeStruct((M, B, 8, _LANES), jnp.float32),
        grid_spec=pltpu.PrefetchScalarGridSpec(
            num_scalar_prefetch=1,                          # lend -> SMEM
            grid=(M, B, nf),
            in_specs=[
                pl.BlockSpec((None, None, r_tile, _LANES),
                             lambda m, b, f, _lend: (m, b, f, 0)),
                pl.BlockSpec((None, None, r_tile, _LANES),
                             lambda m, b, f, _lend: (m, b, f, 0)),
            ],
            out_specs=pl.BlockSpec((None, None, 8, _LANES),
                                   lambda m, b, f, _lend: (m, b, 0, 0)),
        ),
        compiler_params=pltpu.CompilerParams(
            dimension_semantics=("parallel", "parallel", "arbitrary"),
            vmem_limit_bytes=_VMEM_LIMIT_BYTES,
        ),
    )(lend, pred3, inp3)

    # Tiny final reduce/normalize on (M, B) values; NaN for length==0 matches PyTorch.
    sse = jnp.sum(out, axis=(2, 3))                         # (M, B) unscaled SSE
    denom = lend.astype(jnp.float32)                        # (B,)
    per_example_mean = sse / denom[None, :]
    return jnp.sum(per_example_mean) / (M * B)


def _reference(pred, inp, lengths):
    M, B, T, D = pred.shape
    loss = 0.0
    for m in range(M):
        for b in range(B):
            L = min(int(lengths[b]), T)
            d = pred[m, b, :L] - inp[m, b, :L]
            loss += jnp.mean(d * d)
    return loss / (M * B)


if __name__ == "__main__":
    key = jax.random.PRNGKey(0)
    M, B, T, D = 2, 2, 16, 32  # 2 modalities, batch 2, seq 16, hidden 32

    k1, k2 = jax.random.split(key)
    pred = jax.random.normal(k1, (M, B, T, D), dtype=jnp.float32)
    inp = jax.random.normal(k2, (M, B, T, D), dtype=jnp.float32)
    lengths = jnp.array([10, 16], dtype=jnp.int32)

    loss_fn = jax.jit(reconstruction_mse_loss)
    loss = loss_fn(pred, inp, lengths)
    jax.block_until_ready(loss)

    ref = _reference(pred, inp, lengths)
    assert jnp.allclose(loss, ref, rtol=1e-5, atol=1e-6), (loss, ref)
    print("KERNEL_OK")
</pallas_src>

<mosaic_0001>
module attributes {stable_mosaic.version = 11 : i64} {
  func.func @_recon_mse_kernel(%arg0: i32, %arg1: i32, %arg2: i32, %arg3: memref<2xi32, #tpu.memory_space<smem>>, %arg4: memref<1x1x64x128xf32, #tpu.memory_space<vmem>>, %arg5: memref<1x1x64x128xf32, #tpu.memory_space<vmem>>, %arg6: memref<1x1x8x128xf32, #tpu.memory_space<vmem>>) attributes {dimension_semantics = [#tpu.dimension_semantics<parallel>, #tpu.dimension_semantics<parallel>, #tpu.dimension_semantics<arbitrary>], iteration_bounds = array<i64: 2, 2, 1>, scalar_prefetch = 1 : i64, scratch_operands = 0 : i64, tpu.core_type = #tpu.core_type<tc>, window_params = [{transform_indices = @transform_0, window_bounds = array<i64: 1, 1, 64, 128>}, {transform_indices = @transform_1, window_bounds = array<i64: 1, 1, 64, 128>}, {transform_indices = @transform_2, window_bounds = array<i64: 1, 1, 8, 128>}]} {
    %c0_i32 = arith.constant 0 : i32
    %0 = arith.cmpi eq, %arg2, %c0_i32 : i32
    %1 = arith.extui %0 : i1 to i32
    %c0_i32_0 = arith.constant 0 : i32
    %2 = arith.cmpi ne, %1, %c0_i32_0 : i32
    scf.if %2 {
      %cst = arith.constant 0.000000e+00 : f32
      %20 = vector.broadcast %cst : f32 to vector<8x128xf32>
      %c0 = arith.constant 0 : index
      %c0_4 = arith.constant 0 : index
      %c0_5 = arith.constant 0 : index
      %c0_6 = arith.constant 0 : index
      %21 = vector.load %arg6[%c0, %c0_4, %c0_5, %c0_6] : memref<1x1x8x128xf32, #tpu.memory_space<vmem>>, vector<1x1x8x128xf32>
      %22 = vector.shape_cast %21 : vector<1x1x8x128xf32> to vector<8x128xf32>
      %23 = vector.shape_cast %20 : vector<8x128xf32> to vector<1x1x8x128xf32>
      tpu.vector_store %arg6[%c0, %c0_4, %c0_5, %c0_6], %23 {strides = array<i32>} : memref<1x1x8x128xf32, #tpu.memory_space<vmem>>, vector<1x1x8x128xf32>,
    } else {
    }
    %3 = arith.index_cast %arg1 : i32 to index
    %4 = memref.load %arg3[%3] : memref<2xi32, #tpu.memory_space<smem>>
    %c8192_i32 = arith.constant 8192 : i32
    %5 = arith.muli %arg2, %c8192_i32 : i32
    %c8192_i32_1 = arith.constant 8192 : i32
    %6 = arith.addi %5, %c8192_i32_1 : i32
    %7 = tpu.iota {dimensions = array<i32: 0>} : vector<64x128xi32>
    %c128_i32 = arith.constant 128 : i32
    %8 = vector.broadcast %c128_i32 : i32 to vector<64x128xi32>
    %9 = arith.muli %7, %8 : vector<64x128xi32>
    %10 = tpu.iota {dimensions = array<i32: 1>} : vector<64x128xi32>
    %11 = arith.addi %9, %10 : vector<64x128xi32>
    %12 = arith.cmpi sle, %6, %4 : i32
    %13 = arith.extui %12 : i1 to i32
    %c0_i32_2 = arith.constant 0 : i32
    %14 = arith.cmpi ne, %13, %c0_i32_2 : i32
    scf.if %14 {
      %cst = arith.constant 0.000000e+00 : f32
      %20 = vector.broadcast %cst : f32 to vector<8x128xf32>
      %c0_i32_4 = arith.constant 0 : i32
      %c64_i32 = arith.constant 64 : i32
      %21 = arith.muli %c0_i32_4, %c64_i32 : i32
      %22 = tpu.assume_multiple %21, 64 : i32
      %c0 = arith.constant 0 : index
      %c0_5 = arith.constant 0 : index
      %23 = arith.index_cast %22 : i32 to index
      %c0_6 = arith.constant 0 : index
      %24 = vector.load %arg4[%c0, %c0_5, %23, %c0_6] : memref<1x1x64x128xf32, #tpu.memory_space<vmem>>, vector<1x1x64x128xf32>
      %25 = vector.shape_cast %24 : vector<1x1x64x128xf32> to vector<64x128xf32>
      %c0_7 = arith.constant 0 : index
      %c0_8 = arith.constant 0 : index
      %26 = arith.index_cast %22 : i32 to index
      %c0_9 = arith.constant 0 : index
      %27 = vector.load %arg5[%c0_7, %c0_8, %26, %c0_9] : memref<1x1x64x128xf32, #tpu.memory_space<vmem>>, vector<1x1x64x128xf32>
      %28 = vector.shape_cast %27 : vector<1x1x64x128xf32> to vector<64x128xf32>
      %29 = arith.subf %25, %28 : vector<64x128xf32>
      %30 = arith.mulf %29, %29 : vector<64x128xf32>
      %31 = vector.shape_cast %30 : vector<64x128xf32> to vector<8x8x128xf32>
      %cst_10 = arith.constant dense<0.000000e+00> : vector<8x128xf32>
      %32 = vector.multi_reduction <add>, %31, %cst_10 [0] : vector<8x8x128xf32> to vector<8x128xf32>
      %33 = arith.addf %20, %32 : vector<8x128xf32>
      %c1_i32 = arith.constant 1 : i32
      %c0_11 = arith.constant 0 : index
      %c0_12 = arith.constant 0 : index
      %c0_13 = arith.constant 0 : index
      %c0_14 = arith.constant 0 : index
      %34 = vector.load %arg6[%c0_11, %c0_12, %c0_13, %c0_14] : memref<1x1x8x128xf32, #tpu.memory_space<vmem>>, vector<1x1x8x128xf32>
      %35 = vector.shape_cast %34 : vector<1x1x8x128xf32> to vector<8x128xf32>
      %36 = arith.addf %35, %33 : vector<8x128xf32>
      %c0_15 = arith.constant 0 : index
      %c0_16 = arith.constant 0 : index
      %c0_17 = arith.constant 0 : index
      %c0_18 = arith.constant 0 : index
      %37 = vector.load %arg6[%c0_15, %c0_16, %c0_17, %c0_18] : memref<1x1x8x128xf32, #tpu.memory_space<vmem>>, vector<1x1x8x128xf32>
      %38 = vector.shape_cast %37 : vector<1x1x8x128xf32> to vector<8x128xf32>
      %39 = vector.shape_cast %36 : vector<8x128xf32> to vector<1x1x8x128xf32>
      tpu.vector_store %arg6[%c0_15, %c0_16, %c0_17, %c0_18], %39 {strides = array<i32>} : memref<1x1x8x128xf32, #tpu.memory_space<vmem>>, vector<1x1x8x128xf32>,
    } else {
    }
    %15 = arith.cmpi slt, %5, %4 : i32
    %16 = arith.cmpi sgt, %6, %4 : i32
    %17 = arith.andi %15, %16 : i1
    %18 = arith.extui %17 : i1 to i32
    %c0_i32_3 = arith.constant 0 : i32
    %19 = arith.cmpi ne, %18, %c0_i32_3 : i32
    scf.if %19 {
      %cst = arith.constant 0.000000e+00 : f32
      %20 = vector.broadcast %cst : f32 to vector<8x128xf32>
      %c0_i32_4 = arith.constant 0 : i32
      %c64_i32 = arith.constant 64 : i32
      %21 = arith.muli %c0_i32_4, %c64_i32 : i32
      %22 = tpu.assume_multiple %21, 64 : i32
      %c0 = arith.constant 0 : index
      %c0_5 = arith.constant 0 : index
      %23 = arith.index_cast %22 : i32 to index
      %c0_6 = arith.constant 0 : index
      %24 = vector.load %arg4[%c0, %c0_5, %23, %c0_6] : memref<1x1x64x128xf32, #tpu.memory_space<vmem>>, vector<1x1x64x128xf32>
      %25 = vector.shape_cast %24 : vector<1x1x64x128xf32> to vector<64x128xf32>
      %c0_7 = arith.constant 0 : index
      %c0_8 = arith.constant 0 : index
      %26 = arith.index_cast %22 : i32 to index
      %c0_9 = arith.constant 0 : index
      %27 = vector.load %arg5[%c0_7, %c0_8, %26, %c0_9] : memref<1x1x64x128xf32, #tpu.memory_space<vmem>>, vector<1x1x64x128xf32>
      %28 = vector.shape_cast %27 : vector<1x1x64x128xf32> to vector<64x128xf32>
      %29 = arith.subf %25, %28 : vector<64x128xf32>
      %30 = arith.mulf %29, %29 : vector<64x128xf32>
      %c8192_i32_10 = arith.constant 8192 : i32
      %31 = arith.muli %c0_i32_4, %c8192_i32_10 : i32
      %32 = arith.addi %5, %31 : i32
      %33 = arith.subi %4, %32 : i32
      %34 = vector.broadcast %33 : i32 to vector<64x128xi32>
      %35 = arith.cmpi slt, %11, %34 : vector<64x128xi32>
      %cst_11 = arith.constant 0.000000e+00 : f32
      %36 = vector.broadcast %cst_11 : f32 to vector<64x128xf32>
      %37 = arith.select %35, %30, %36 : vector<64x128xi1>, vector<64x128xf32>
      %38 = vector.shape_cast %37 : vector<64x128xf32> to vector<8x8x128xf32>
      %cst_12 = arith.constant dense<0.000000e+00> : vector<8x128xf32>
      %39 = vector.multi_reduction <add>, %38, %cst_12 [0] : vector<8x8x128xf32> to vector<8x128xf32>
      %40 = arith.addf %20, %39 : vector<8x128xf32>
      %c1_i32 = arith.constant 1 : i32
      %c0_13 = arith.constant 0 : index
      %c0_14 = arith.constant 0 : index
      %c0_15 = arith.constant 0 : index
      %c0_16 = arith.constant 0 : index
      %41 = vector.load %arg6[%c0_13, %c0_14, %c0_15, %c0_16] : memref<1x1x8x128xf32, #tpu.memory_space<vmem>>, vector<1x1x8x128xf32>
      %42 = vector.shape_cast %41 : vector<1x1x8x128xf32> to vector<8x128xf32>
      %43 = arith.addf %42, %40 : vector<8x128xf32>
      %c0_17 = arith.constant 0 : index
      %c0_18 = arith.constant 0 : index
      %c0_19 = arith.constant 0 : index
      %c0_20 = arith.constant 0 : index
      %44 = vector.load %arg6[%c0_17, %c0_18, %c0_19, %c0_20] : memref<1x1x8x128xf32, #tpu.memory_space<vmem>>, vector<1x1x8x128xf32>
      %45 = vector.shape_cast %44 : vector<1x1x8x128xf32> to vector<8x128xf32>
      %46 = vector.shape_cast %43 : vector<8x128xf32> to vector<1x1x8x128xf32>
      tpu.vector_store %arg6[%c0_17, %c0_18, %c0_19, %c0_20], %46 {strides = array<i32>} : memref<1x1x8x128xf32, #tpu.memory_space<vmem>>, vector<1x1x8x128xf32>,
    } else {
    }
    return
  }
  func.func @transform_0(%arg0: i32, %arg1: i32, %arg2: i32, %arg3: memref<2xi32, #tpu.memory_space<smem>>) -> (i32, i32, i32, i32) {
    %c0_i32 = arith.constant 0 : i32
    %c0_i32_0 = arith.constant 0 : i32
    return %arg0, %arg1, %arg2, %c0_i32 : i32, i32, i32, i32
  }
  func.func @transform_1(%arg0: i32, %arg1: i32, %arg2: i32, %arg3: memref<2xi32, #tpu.memory_space<smem>>) -> (i32, i32, i32, i32) {
    %c0_i32 = arith.constant 0 : i32
    %c0_i32_0 = arith.constant 0 : i32
    return %arg0, %arg1, %arg2, %c0_i32 : i32, i32, i32, i32
  }
  func.func @transform_2(%arg0: i32, %arg1: i32, %arg2: i32, %arg3: memref<2xi32, #tpu.memory_space<smem>>) -> (i32, i32, i32, i32) {
    %c0_i32 = arith.constant 0 : i32
    %c0_i32_0 = arith.constant 0 : i32
    %c0_i32_1 = arith.constant 0 : i32
    return %arg0, %arg1, %c0_i32, %c0_i32_0 : i32, i32, i32, i32
  }
}

</mosaic_0001>

<llo_original>
// kernel: reconstruction_mse_loss.1
$region0: #{reconstruction_mse_loss.1}
  #allocation0 [shape = 'u32[]', space=smem, size = 0x4, offset = 0x4, fixed_abs, tag = 'smem constant byte address 0x4 - core index']
  #allocation1 [shape = 'u32[72,128]{1,0:T(1,128)}', space=vmem, size = 0x9000, scoped, tag = 'internal scratch']
  #allocation2 [shape = 's32[1]{0}', space=sflag, size = 0x4, scoped, tag = 'scoped memory for reconstruction_mse_loss.1']
  #allocation3 [shape = 'u8[512]{0}', space=smem, size = 0x200, scoped, tag = 'prefetched SMEM operand 0']
  %s0 = inlined_call_operand.vmem [shape: s32[2], index: 0, kind: input, shape index: {}]
  %s1 = inlined_call_operand.vmem [shape: f32[2,2,4,128], index: 1, kind: input, shape index: {}]
  %s2 = inlined_call_operand.vmem [shape: f32[2,2,4,128], index: 2, kind: input, shape index: {}]
  %s3 = inlined_call_operand.vmem [shape: f32[2,2,8,128], index: 3, kind: output, shape index: {}]
  %s4 = sld [smem:[#allocation0]]
  $region53: #{reconstruction_mse_loss.1} parent=0
    _
  %s6 = ssub.s32 1, %s4
  %s7 = scalar_select 0, %s6, %s4
  %s9 = sshll.u32 %s0, 4
  %s10 = int_to_ptr.vmem [resolvable:$true] %s9
  %12 = dma.vmem_to_smem %s10, 16, [#allocation3], [#allocation2]
  %14 = dma.done [#allocation2], 16
  %15 = sfence
  loop: start=0, step=1, limit=6
  $region2: #{reconstruction_mse_loss.1} parent=0 // loop_pre_header
    _
  $region3: #{reconstruction_mse_loss.1} parent=0 // loop_header
    %s17 = sphi 0, %s21
    %p18 = scmp.ge.s32.totalorder %s17, 6
    %s24 = sphi 0, %s43
    %s25 = sphi 0, %s39
    %s26 = sphi 0, %s35
    %s27 = sphi 0, %s24
    %s28 = sphi 0, %s25
    %s29 = sphi 0, %s26
    %s30 = sphi 0, %s27
    %s31 = sphi 0, %s28
    %s32 = sphi 0, %s29
    %s50 = sphi 0, %s52
    %s53 = sphi 0, %s50
    %s54 = sphi 0, %s53
    %s70 = sphi 0, %s54
    %s80 = sphi 0, %s82
    %s83 = sphi 0, %s80
    %s84 = sphi 0, %s83
    %s100 = sphi 0, %s84
    %s108 = sphi 0, %s110
    %s111 = sphi 0, %s108
    %s112 = sphi 0, %s111
    %s128 = sphi 0, %s112
  $region4: #{reconstruction_mse_loss.1} parent=0 // loop_header_branch
    %20 = sbr.rel (%p18) target = $region8
  $region5: #{reconstruction_mse_loss.1} parent=0 // loop_body
    %s22 = ssub.s32 %s17, 1
    %s23 = ssub.s32 %s17, 2
    %s33 = sadd.s32 1, %s26
    %p34 = scmp.ge.s32.totalorder %s33, 1
    %s35 = scalar_select %p34, 0, %s33
    %s36 = sadd.s32 1, %s25
    %s37 = scalar_select %p34, %s36, %s25
    %p38 = scmp.ge.s32.totalorder %s37, 2
    %s39 = scalar_select %p38, 0, %s37
    %s40 = sadd.s32 1, %s24
    %s41 = scalar_select %p38, %s40, %s24
    %p42 = scmp.ge.s32.totalorder %s41, 2
    %s43 = scalar_select %p42, 0, %s41
    %s44 = ssub.s32 %s24, %s43
    %s45 = ssub.s32 %s25, %s39
    %s46 = sor.u32 %s44, %s45
    %s47 = ssub.s32 %s26, %s35
    %s48 = sor.u32 %s46, %s47
    %p49 = scmp.eq.s32.totalorder %s48, 0
    %s51 = sadd.s32 %s50, 1
    %s52 = scalar_select %p49, %s50, %s51
    %p55 = pneg %p49
    %p56 = scmp.eq.s32.totalorder %s17, 3
    %p57 = por %p55, %p56
    %p58 = scmp.ne.s32.totalorder %s50, %s53
    %p59 = scmp.eq.s32.totalorder %s17, 0
    %p60 = por %p58, %p59
    %p61 = scmp.ne.s32.totalorder %s50, %s53
    %p62 = scmp.eq.s32.totalorder %s22, 3
    %p63 = por %p61, %p62
    %p64 = scmp.ne.s32.totalorder %s53, %s54
    %p65 = scmp.eq.s32.totalorder %s22, 0
    %p66 = por %p64, %p65
    %p67 = scmp.ne.s32.totalorder %s53, %s54
    %p68 = scmp.eq.s32.totalorder %s23, 3
    %p69 = por %p67, %p68
    %p71 = scmp.ne.s32.totalorder %s54, %s70
    %p72 = scmp.eq.s32.totalorder %s23, 0
    %p73 = por %p71, %p72
    %s74 = ssub.s32 %s24, %s43
    %s75 = ssub.s32 %s25, %s39
    %s76 = sor.u32 %s74, %s75
    %s77 = ssub.s32 %s26, %s35
    %s78 = sor.u32 %s76, %s77
    %p79 = scmp.eq.s32.totalorder %s78, 0
    %s81 = sadd.s32 %s80, 1
    %s82 = scalar_select %p79, %s80, %s81
    %p85 = pneg %p79
    %p86 = scmp.eq.s32.totalorder %s17, 3
    %p87 = por %p85, %p86
    %p88 = scmp.ne.s32.totalorder %s80, %s83
    %p89 = scmp.eq.s32.totalorder %s17, 0
    %p90 = por %p88, %p89
    %p91 = scmp.ne.s32.totalorder %s80, %s83
    %p92 = scmp.eq.s32.totalorder %s22, 3
    %p93 = por %p91, %p92
    %p94 = scmp.ne.s32.totalorder %s83, %s84
    %p95 = scmp.eq.s32.totalorder %s22, 0
    %p96 = por %p94, %p95
    %p97 = scmp.ne.s32.totalorder %s83, %s84
    %p98 = scmp.eq.s32.totalorder %s23, 3
    %p99 = por %p97, %p98
    %p101 = scmp.ne.s32.totalorder %s84, %s100
    %p102 = scmp.eq.s32.totalorder %s23, 0
    %p103 = por %p101, %p102
    %s104 = ssub.s32 %s24, %s43
    %s105 = ssub.s32 %s25, %s39
    %s106 = sor.u32 %s104, %s105
    %p107 = scmp.eq.s32.totalorder %s106, 0
    %s109 = sadd.s32 %s108, 1
    %s110 = scalar_select %p107, %s108, %s109
    %p113 = pneg %p107
    %p114 = scmp.eq.s32.totalorder %s17, 3
    %p115 = por %p113, %p114
    %p116 = scmp.ne.s32.totalorder %s108, %s111
    %p117 = scmp.eq.s32.totalorder %s17, 0
    %p118 = por %p116, %p117
    %p119 = scmp.ne.s32.totalorder %s108, %s111
    %p120 = scmp.eq.s32.totalorder %s22, 3
    %p121 = por %p119, %p120
    %p122 = scmp.ne.s32.totalorder %s111, %s112
    %p123 = scmp.eq.s32.totalorder %s22, 0
    %p124 = por %p122, %p123
    %p125 = scmp.ne.s32.totalorder %s111, %s112
    %p126 = scmp.eq.s32.totalorder %s23, 3
    %p127 = por %p125, %p126
    %p129 = scmp.ne.s32.totalorder %s112, %s128
    %p130 = scmp.eq.s32.totalorder %s23, 0
    %p131 = por %p129, %p130
    %p132 = scmp.le.s32.totalorder 1, %s17
    %p133 = scmp.lt.s32.totalorder %s17, 5
    %p134 = pnand %p132, %p133
    %p135 = pneg %p134
    // Predicated region
    $region9: #{reconstruction_mse_loss.1} parent=5 // pred_check
      _
    $region10: #{reconstruction_mse_loss.1} parent=5 // pred_check_branch
      %137 = sbr.rel (%p134) target = $region12
    $region11: #{reconstruction_mse_loss.1} parent=5 // pred_region
      %s138 = ssub.s32 %s17, 1
    $region12: #{reconstruction_mse_loss.1} parent=5 // pred_fallthru
      _
    %p139 = scmp.lt.s32.totalorder %s17, 4
    // Predicated region
    $region13: #{reconstruction_mse_loss.1} parent=5 // pred_check
      %p140 = pneg %p139
    $region14: #{reconstruction_mse_loss.1} parent=5 // pred_check_branch
      %142 = sbr.rel (%p140) target = $region16
    $region15: #{reconstruction_mse_loss.1} parent=5 // pred_region
      // Predicated region
      $region17: #{reconstruction_mse_loss.1} parent=15 // pred_check
        %p143 = pneg %p60
      $region18: #{reconstruction_mse_loss.1} parent=15 // pred_check_branch
        %145 = sbr.rel (%p143) target = $region20
      $region19: #{reconstruction_mse_loss.1} parent=15 // pred_region
        %s146 = smul.u32 16, %s26
        %s147 = ssub.s32 1, %s146
        %s148 = smul.u32 4, %s147
        %p149 = scmp.lt.s32.totalorder %s24, 1
        %s150 = scalar_select %p149, %s24, 1
        %p151 = scmp.lt.s32.totalorder %s25, 1
        %s152 = scalar_select %p151, %s25, 1
        %p153 = scmp.lt.s32.totalorder %s146, 0
        %s154 = scalar_select %p153, %s146, 0
        %s155 = sadd.s32 %s154, %s152
        %s156 = smul.addr %s150, 2
        %s157 = sadd.s32 %s155, %s156
        %s158 = smul.addr %s157, 4
        %s159 = scalar_lea.vmem %s1, %s158
        %s160 = smul.u32 16, %s26
        %s161 = ssub.s32 1, %s160
        %s162 = smul.u32 4, %s161
      $region20: #{reconstruction_mse_loss.1} parent=15 // pred_fallthru
        _
      // Predicated region
      $region21: #{reconstruction_mse_loss.1} parent=15 // pred_check
        %p163 = pneg %p90
      $region22: #{reconstruction_mse_loss.1} parent=15 // pred_check_branch
        %165 = sbr.rel (%p163) target = $region24
      $region23: #{reconstruction_mse_loss.1} parent=15 // pred_region
        %s166 = smul.u32 16, %s26
        %s167 = ssub.s32 1, %s166
        %s168 = smul.u32 4, %s167
        %p169 = scmp.lt.s32.totalorder %s24, 1
        %s170 = scalar_select %p169, %s24, 1
        %p171 = scmp.lt.s32.totalorder %s25, 1
        %s172 = scalar_select %p171, %s25, 1
        %p173 = scmp.lt.s32.totalorder %s166, 0
        %s174 = scalar_select %p173, %s166, 0
        %s175 = sadd.s32 %s174, %s172
        %s176 = smul.addr %s170, 2
        %s177 = sadd.s32 %s175, %s176
        %s178 = smul.addr %s177, 4
        %s179 = scalar_lea.vmem %s2, %s178
        %s180 = smul.u32 16, %s26
        %s181 = ssub.s32 1, %s180
        %s182 = smul.u32 4, %s181
      $region24: #{reconstruction_mse_loss.1} parent=15 // pred_fallthru
        _
    $region16: #{reconstruction_mse_loss.1} parent=5 // pred_fallthru
      _
    %p183 = scmp.le.s32.totalorder 1, %s17
    %p184 = scmp.lt.s32.totalorder %s17, 5
    %p185 = pnand %p183, %p184
    %p186 = pneg %p185
    // Predicated region
    $region25: #{reconstruction_mse_loss.1} parent=5 // pred_check
      _
    $region26: #{reconstruction_mse_loss.1} parent=5 // pred_check_branch
      %188 = sbr.rel (%p185) target = $region28
    $region27: #{reconstruction_mse_loss.1} parent=5 // pred_region
      %s189 = ssub.s32 %s17, 1
      %s190 = smul.u32 16, %s29
      %s191 = ssub.s32 1, %s190
      %s192 = smul.u32 4, %s191
      %p193 = scmp.lt.s32.totalorder %s27, 1
      %s194 = scalar_select %p193, %s27, 1
      %p195 = scmp.lt.s32.totalorder %s28, 1
      %s196 = scalar_select %p195, %s28, 1
      %p197 = scmp.lt.s32.totalorder %s190, 0
      %s198 = scalar_select %p197, %s190, 0
      %s199 = sadd.s32 %s198, %s196
      %s200 = smul.addr %s194, 2
      %s201 = sadd.s32 %s199, %s200
      %s202 = smul.addr %s201, 4
      %s203 = scalar_lea.vmem %s1, %s202
      %p204 = pneg %p66
      %p205 = pneg %p63
      %s206 = smul.u32 16, %s29
      %s207 = ssub.s32 1, %s206
      %s208 = smul.u32 4, %s207
      %p209 = scmp.lt.s32.totalorder %s27, 1
      %s210 = scalar_select %p209, %s27, 1
      %p211 = scmp.lt.s32.totalorder %s28, 1
      %s212 = scalar_select %p211, %s28, 1
      %p213 = scmp.lt.s32.totalorder %s206, 0
      %s214 = scalar_select %p213, %s206, 0
      %s215 = sadd.s32 %s214, %s212
      %s216 = smul.addr %s210, 2
      %s217 = sadd.s32 %s215, %s216
      %s218 = smul.addr %s217, 4
      %s219 = scalar_lea.vmem %s2, %s218
      %p220 = pneg %p96
      %p221 = pneg %p93
      %p222 = pneg %p124
      %p223 = pneg %p121
      %p224 = scmp.lt.s32.totalorder %s27, 1
      %s225 = scalar_select %p224, %s27, 1
      %p226 = scmp.lt.s32.totalorder %s28, 1
      %s227 = scalar_select %p226, %s28, 1
      %s228 = smul.addr %s225, 2
      %s229 = sadd.s32 %s227, %s228
      %s230 = smul.addr %s229, 8
      %s231 = scalar_lea.vmem %s3, %s230
      %s232 = smul.u32 16, %s29
      %s233 = ssub.s32 1, %s232
      %s234 = smul.u32 4, %s233
      %p235 = scmp.lt.s32.totalorder %s27, 1
      %s236 = scalar_select %p235, %s27, 1
      %p237 = scmp.lt.s32.totalorder %s28, 1
      %s238 = scalar_select %p237, %s28, 1
      %p239 = scmp.lt.s32.totalorder %s232, 0
      %s240 = scalar_select %p239, %s232, 0
      %s241 = sadd.s32 %s240, %s238
      %s242 = smul.addr %s236, 2
      %s243 = sadd.s32 %s241, %s242
      %s244 = smul.addr %s243, 4
      %s245 = scalar_lea.vmem %s1, %s244
      %s246 = smul.u32 16, %s29
      %s247 = ssub.s32 1, %s246
      %s248 = smul.u32 4, %s247
      %s249 = smul.u32 16, %s29
      %s250 = ssub.s32 1, %s249
      %s251 = smul.u32 4, %s250
      %p252 = scmp.lt.s32.totalorder %s27, 1
      %s253 = scalar_select %p252, %s27, 1
      %p254 = scmp.lt.s32.totalorder %s28, 1
      %s255 = scalar_select %p254, %s28, 1
      %p256 = scmp.lt.s32.totalorder %s249, 0
      %s257 = scalar_select %p256, %s249, 0
      %s258 = sadd.s32 %s257, %s255
      %s259 = smul.addr %s253, 2
      %s260 = sadd.s32 %s258, %s259
      %s261 = smul.addr %s260, 4
      %s262 = scalar_lea.vmem %s2, %s261
      %s263 = smul.u32 16, %s29
      %s264 = ssub.s32 1, %s263
      %s265 = smul.u32 4, %s264
      %p266 = scmp.lt.s32.totalorder %s27, 1
      %s267 = scalar_select %p266, %s27, 1
      %p268 = scmp.lt.s32.totalorder %s28, 1
      %s269 = scalar_select %p268, %s28, 1
      %s270 = smul.addr %s267, 2
      %s271 = sadd.s32 %s269, %s270
      %s272 = smul.addr %s271, 8
      %s273 = scalar_lea.vmem %s3, %s272
      %p274 = scmp.eq.s32.totalorder %s29, 0
      // Predicated region
      $region29: #{reconstruction_mse_loss.1} parent=27 // pred_check
        %p275 = pneg %p274
      $region30: #{reconstruction_mse_loss.1} parent=27 // pred_check_branch
        %277 = sbr.rel (%p275) target = $region32
      $region31: #{reconstruction_mse_loss.1} parent=27 // pred_region
        %278 = vst [vmem:[%s273] sm:$0xff] 0.0
      $region32: #{reconstruction_mse_loss.1} parent=27 // pred_fallthru
        _
      %s279 = sld [smem:[#allocation3 + %s28]]
      %s280 = smul.u32 %s29, 8192
      %s281 = sadd.s32 %s280, 8192
      %v282 = vlaneseq
      %v283 = vshrl.u32 %v282, 7
      %v284 = vadd.s32 %v283, 8
      %v285 = vadd.s32 %v283, 16
      %v286 = vadd.s32 %v283, 24
      %v287 = vadd.s32 %v283, 32
      %v288 = vadd.s32 %v283, 40
      %v289 = vadd.s32 %v283, 48
      %v290 = vadd.s32 %v283, 56
      %v291 = vmul.u32 %v283, 128
      %v292 = vmul.u32 %v284, 128
      %v293 = vmul.u32 %v285, 128
      %v294 = vmul.u32 %v286, 128
      %v295 = vmul.u32 %v287, 128
      %v296 = vmul.u32 %v288, 128
      %v297 = vmul.u32 %v289, 128
      %v298 = vmul.u32 %v290, 128
      %v299 = vlaneseq
      %v300 = vand.u32 %v299, 127
      %v301 = vadd.s32 %v291, %v300
      %v302 = vadd.s32 %v292, %v300
      %v303 = vadd.s32 %v293, %v300
      %v304 = vadd.s32 %v294, %v300
      %v305 = vadd.s32 %v295, %v300
      %v306 = vadd.s32 %v296, %v300
      %v307 = vadd.s32 %v297, %v300
      %v308 = vadd.s32 %v298, %v300
      %p309 = scmp.le.s32.totalorder %s281, %s279
      // Predicated region
      $region33: #{reconstruction_mse_loss.1} parent=27 // pred_check
        %p310 = pneg %p309
      $region34: #{reconstruction_mse_loss.1} parent=27 // pred_check_branch
        %312 = sbr.rel (%p310) target = $region36
      $region35: #{reconstruction_mse_loss.1} parent=27 // pred_region
        %v313 = vld [vmem:[%s245] sm:$0xff]
        %v314 = vld [vmem:[%s245 + $0x8] sm:$0xff]
        %v315 = vld [vmem:[%s245 + $0x10] sm:$0xff]
        %v316 = vld [vmem:[%s245 + $0x18] sm:$0xff]
        %v317 = vld [vmem:[%s245 + $0x20] sm:$0xff]
        %v318 = vld [vmem:[%s245 + $0x28] sm:$0xff]
        %v319 = vld [vmem:[%s245 + $0x30] sm:$0xff]
        %v320 = vld [vmem:[%s245 + $0x38] sm:$0xff]
        %v321 = vld [vmem:[%s262] sm:$0xff]
        %v322 = vld [vmem:[%s262 + $0x8] sm:$0xff]
        %v323 = vld [vmem:[%s262 + $0x10] sm:$0xff]
        %v324 = vld [vmem:[%s262 + $0x18] sm:$0xff]
        %v325 = vld [vmem:[%s262 + $0x20] sm:$0xff]
        %v326 = vld [vmem:[%s262 + $0x28] sm:$0xff]
        %v327 = vld [vmem:[%s262 + $0x30] sm:$0xff]
        %v328 = vld [vmem:[%s262 + $0x38] sm:$0xff]
        %v329 = vsub.f32 %v313, %v321
        %v330 = vsub.f32 %v314, %v322
        %v331 = vsub.f32 %v315, %v323
        %v332 = vsub.f32 %v316, %v324
        %v333 = vsub.f32 %v317, %v325
        %v334 = vsub.f32 %v318, %v326
        %v335 = vsub.f32 %v319, %v327
        %v336 = vsub.f32 %v320, %v328
        %v337 = vmul.f32 %v329, %v329
        %v338 = vmul.f32 %v330, %v330
        %v339 = vmul.f32 %v331, %v331
        %v340 = vmul.f32 %v332, %v332
        %v341 = vmul.f32 %v333, %v333
        %v342 = vmul.f32 %v334, %v334
        %v343 = vmul.f32 %v335, %v335
        %v344 = vmul.f32 %v336, %v336
        %v345 = vadd.f32 %v337, %v338
        %v346 = vadd.f32 %v345, %v339
        %v347 = vadd.f32 %v346, %v340
        %v348 = vadd.f32 %v347, %v341
        %v349 = vadd.f32 %v348, %v342
        %v350 = vadd.f32 %v349, %v343
        %v351 = vadd.f32 %v350, %v344
        %v352 = vadd.f32 %v351, 0.0
        %v353 = vld [vmem:[%s273] sm:$0xff]
        %v354 = vadd.f32 %v353, %v352
        %355 = vst [vmem:[%s273] sm:$0xff] %v354
      $region36: #{reconstruction_mse_loss.1} parent=27 // pred_fallthru
        _
      %p356 = scmp.lt.s32.totalorder %s280, %s279
      %p357 = scmp.gt.s32.totalorder %s281, %s279
      %p358 = pnand %p356, %p357
      %p359 = pneg %p358
      // Predicated region
      $region37: #{reconstruction_mse_loss.1} parent=27 // pred_check
        _
      $region38: #{reconstruction_mse_loss.1} parent=27 // pred_check_branch
        %361 = sbr.rel (%p358) target = $region40
      $region39: #{reconstruction_mse_loss.1} parent=27 // pred_region
        %v362 = vld [vmem:[%s245] sm:$0xff]
        %v363 = vld [vmem:[%s245 + $0x8] sm:$0xff]
        %v364 = vld [vmem:[%s245 + $0x10] sm:$0xff]
        %v365 = vld [vmem:[%s245 + $0x18] sm:$0xff]
        %v366 = vld [vmem:[%s245 + $0x20] sm:$0xff]
        %v367 = vld [vmem:[%s245 + $0x28] sm:$0xff]
        %v368 = vld [vmem:[%s245 + $0x30] sm:$0xff]
        %v369 = vld [vmem:[%s245 + $0x38] sm:$0xff]
        %v370 = vld [vmem:[%s262] sm:$0xff]
        %v371 = vld [vmem:[%s262 + $0x8] sm:$0xff]
        %v372 = vld [vmem:[%s262 + $0x10] sm:$0xff]
        %v373 = vld [vmem:[%s262 + $0x18] sm:$0xff]
        %v374 = vld [vmem:[%s262 + $0x20] sm:$0xff]
        %v375 = vld [vmem:[%s262 + $0x28] sm:$0xff]
        %v376 = vld [vmem:[%s262 + $0x30] sm:$0xff]
        %v377 = vld [vmem:[%s262 + $0x38] sm:$0xff]
        %v378 = vsub.f32 %v362, %v370
        %v379 = vsub.f32 %v363, %v371
        %v380 = vsub.f32 %v364, %v372
        %v381 = vsub.f32 %v365, %v373
        %v382 = vsub.f32 %v366, %v374
        %v383 = vsub.f32 %v367, %v375
        %v384 = vsub.f32 %v368, %v376
        %v385 = vsub.f32 %v369, %v377
        %v386 = vmul.f32 %v378, %v378
        %v387 = vmul.f32 %v379, %v379
        %v388 = vmul.f32 %v380, %v380
        %v389 = vmul.f32 %v381, %v381
        %v390 = vmul.f32 %v382, %v382
        %v391 = vmul.f32 %v383, %v383
        %v392 = vmul.f32 %v384, %v384
        %v393 = vmul.f32 %v385, %v385
        %s394 = ssub.s32 %s279, %s280
        %v395 = vstv %s394
        %vm396 = vcmp.lt.s32.totalorder %v301, %v395
        %vm397 = vcmp.lt.s32.totalorder %v302, %v395
        %vm398 = vcmp.lt.s32.totalorder %v303, %v395
        %vm399 = vcmp.lt.s32.totalorder %v304, %v395
        %vm400 = vcmp.lt.s32.totalorder %v305, %v395
        %vm401 = vcmp.lt.s32.totalorder %v306, %v395
        %vm402 = vcmp.lt.s32.totalorder %v307, %v395
        %vm403 = vcmp.lt.s32.totalorder %v308, %v395
        %v404 = vsel %vm396, %v386, 0.0
        %v405 = vsel %vm397, %v387, 0.0
        %v406 = vsel %vm398, %v388, 0.0
        %v407 = vsel %vm399, %v389, 0.0
        %v408 = vsel %vm400, %v390, 0.0
        %v409 = vsel %vm401, %v391, 0.0
        %v410 = vsel %vm402, %v392, 0.0
        %v411 = vsel %vm403, %v393, 0.0
        %v412 = vadd.f32 %v404, %v405
        %v413 = vadd.f32 %v412, %v406
        %v414 = vadd.f32 %v413, %v407
        %v415 = vadd.f32 %v414, %v408
        %v416 = vadd.f32 %v415, %v409
        %v417 = vadd.f32 %v416, %v410
        %v418 = vadd.f32 %v417, %v411
        %v419 = vadd.f32 %v418, 0.0
        %v420 = vld [vmem:[%s273] sm:$0xff]
        %v421 = vadd.f32 %v420, %v419
        %422 = vst [vmem:[%s273] sm:$0xff] %v421
      $region40: #{reconstruction_mse_loss.1} parent=27 // pred_fallthru
        _
      %p423 = scmp.lt.s32.totalorder %s27, 1
      %s424 = scalar_select %p423, %s27, 1
      %p425 = scmp.lt.s32.totalorder %s28, 1
      %s426 = scalar_select %p425, %s28, 1
      %s427 = smul.addr %s424, 2
      %s428 = sadd.s32 %s426, %s427
      %s429 = smul.addr %s428, 8
      %s430 = scalar_lea.vmem %s3, %s429
      // Predicated region
      $region41: #{reconstruction_mse_loss.1} parent=27 // pred_check
        %p431 = pneg %p121
      $region42: #{reconstruction_mse_loss.1} parent=27 // pred_check_branch
        %433 = sbr.rel (%p431) target = $region44
      $region43: #{reconstruction_mse_loss.1} parent=27 // pred_region
        _
      $region44: #{reconstruction_mse_loss.1} parent=27 // pred_fallthru
        _
    $region28: #{reconstruction_mse_loss.1} parent=5 // pred_fallthru
      _
    %p434 = scmp.le.s32.totalorder 2, %s17
    // Predicated region
    $region45: #{reconstruction_mse_loss.1} parent=5 // pred_check
      %p435 = pneg %p434
    $region46: #{reconstruction_mse_loss.1} parent=5 // pred_check_branch
      %437 = sbr.rel (%p435) target = $region48
    $region47: #{reconstruction_mse_loss.1} parent=5 // pred_region
      %s438 = ssub.s32 %s17, 2
      // Predicated region
      $region49: #{reconstruction_mse_loss.1} parent=47 // pred_check
        %p439 = pneg %p127
      $region50: #{reconstruction_mse_loss.1} parent=47 // pred_check_branch
        %441 = sbr.rel (%p439) target = $region52
      $region51: #{reconstruction_mse_loss.1} parent=47 // pred_region
        %p442 = scmp.lt.s32.totalorder %s30, 1
        %s443 = scalar_select %p442, %s30, 1
        %p444 = scmp.lt.s32.totalorder %s31, 1
        %s445 = scalar_select %p444, %s31, 1
        %s446 = smul.addr %s443, 2
        %s447 = sadd.s32 %s445, %s446
        %s448 = smul.addr %s447, 8
        %s449 = scalar_lea.vmem %s3, %s448
      $region52: #{reconstruction_mse_loss.1} parent=47 // pred_fallthru
        _
    $region48: #{reconstruction_mse_loss.1} parent=5 // pred_fallthru
      _
  $region6: #{reconstruction_mse_loss.1} parent=0 // loop_footer
    %s21 = sadd.s32 1, %s17
  $region7: #{reconstruction_mse_loss.1} parent=0 // loop_footer_branch
    %16 = sbr.rel target = $region3
  $region8: #{reconstruction_mse_loss.1} parent=0 // loop_exit
    _

</llo_original>
